<compile_context>
chip_gen: v7x
topology: tpu7x:2x2x1
jax: 0.10.0
libtpu: 0.0.40
codegen_flags: <defaults>
</compile_context>

<pallas_src>
import functools

import jax
import jax.numpy as jnp
from jax.experimental import pallas as pl
from jax.experimental.pallas import tpu as pltpu


def _smoothed_ce_kernel(x_ref, tgt_ref, out_ref, *, v_on, v_off, block_b, total_rows):
    # x_ref: (TB, C) logits tile; tgt_ref: (TB, 1) int32 class ids;
    # out_ref: (1, 8, 128) lane-dense per-tile partial-sum block.
    x = x_ref[...].astype(jnp.float32)
    tb, c = x.shape

    # Numerically stable log-softmax pieces (one exp per element, one log per row).
    m = jnp.max(x, axis=-1, keepdims=True)                              # (TB, 1)
    shifted = x - m                                                     # (TB, C)
    lse = jnp.log(jnp.sum(jnp.exp(shifted), axis=-1, keepdims=True))    # (TB, 1)

    # sum_j logprob_j = sum_j shifted_j - C * lse
    sum_lp = jnp.sum(shifted, axis=-1, keepdims=True) - c * lse         # (TB, 1)

    # logprob at the target class via masked-select reduction (no one-hot tile).
    classes = jax.lax.broadcasted_iota(jnp.int32, (tb, c), 1)
    hit = classes == tgt_ref[...]
    shift_tgt = jnp.sum(jnp.where(hit, shifted, 0.0), axis=-1, keepdims=True)
    lp_tgt = shift_tgt - lse                                            # (TB, 1)

    # clamp(one_hot, lo, conf) == v_off + (v_on - v_off) * one_hot (constants).
    row_loss = -(v_off * sum_lp + (v_on - v_off) * lp_tgt)              # (TB, 1)

    # Mask batch-padding rows; the wrapper divides by the global batch size.
    rows = pl.program_id(0) * block_b + jax.lax.broadcasted_iota(jnp.int32, (tb, 1), 0)
    row_loss = jnp.where(rows < total_rows, row_loss, 0.0)

    out_ref[...] = jnp.broadcast_to(jnp.sum(row_loss), (1, 8, 128))


def smoothed_cross_entropy_loss(logits, target1, target2=None, *,
                                smoothing_alpha, num_classes, model_idx=0,
                                block_b=None):
    """Pallas TPU implementation of SmoothedCrossEntropyLoss.forward.

    logits:  [B, C] float array (f32 or bf16)
    target1: [B]    int class indices
    target2: unused (kept for signature parity with the PyTorch module)
    returns: scalar float32 loss
    """
    del target2  # dead code in the reference forward
    B, C = logits.shape
    assert C == num_classes

    confidence = 1.0 - float(smoothing_alpha)
    lo = float(smoothing_alpha) * float(model_idx) / float(num_classes - 1)
    # clamp applied elementwise to a {0,1} one-hot collapses to two constants
    # (same min-then-max order as torch.clamp, so the degenerate case matches).
    v_on = min(max(1.0, lo), confidence)
    v_off = min(max(0.0, lo), confidence)

    # Pick the batch tile: multiple of 8, capped so the double-buffered logits
    # stream stays well inside scoped VMEM (conservative enough for v7x's 64 MiB).
    if block_b is None:
        bytes_per_row = C * jnp.dtype(logits.dtype).itemsize
        vmem_budget = 8 * 1024 * 1024
        block_b = min(512, max(8, (vmem_budget // max(1, 2 * bytes_per_row))))
    b_round = ((B + 7) // 8) * 8
    block_b = max(8, (min(int(block_b), b_round) // 8) * 8)
    num_tiles = (B + block_b - 1) // block_b
    b_pad = num_tiles * block_b

    x = logits
    tgt = target1.astype(jnp.int32).reshape(B, 1)
    if b_pad != B:
        x = jnp.pad(x, ((0, b_pad - B), (0, 0)))
        tgt = jnp.pad(tgt, ((0, b_pad - B), (0, 0)))

    kernel = functools.partial(
        _smoothed_ce_kernel,
        v_on=v_on, v_off=v_off, block_b=block_b, total_rows=B,
    )

    partials = pl.pallas_call(
        kernel,
        out_shape=jax.ShapeDtypeStruct((num_tiles, 8, 128), jnp.float32),
        grid=(num_tiles,),
        in_specs=[
            pl.BlockSpec((block_b, C), lambda i: (i, 0)),
            pl.BlockSpec((block_b, 1), lambda i: (i, 0)),
        ],
        out_specs=pl.BlockSpec((1, 8, 128), lambda i: (i, 0, 0)),
        compiler_params=pltpu.CompilerParams(
            dimension_semantics=("parallel",),
        ),
    )(x, tgt)

    # Per-tile partials -> global mean over the true batch size.
    return jnp.sum(partials[:, 0, 0]) / B


def _reference(logits, target1, *, smoothing_alpha, num_classes, model_idx=0):
    logprobs = jax.nn.log_softmax(logits.astype(jnp.float32), axis=-1)
    onehot = jax.nn.one_hot(target1, num_classes, dtype=jnp.float32)
    confidence = 1.0 - smoothing_alpha
    lo = smoothing_alpha * model_idx / (num_classes - 1)
    target = jnp.clip(onehot, lo, confidence)
    loss = -jnp.sum(target * logprobs, axis=1)
    return loss.mean()


if __name__ == "__main__":
    key = jax.random.PRNGKey(0)
    B, C = 12, 32          # B not a multiple of the tile -> exercises padding/masking
    alpha = 0.1
    model_idx = 1          # exercises the lower-clamp branch as well

    k1, k2 = jax.random.split(key)
    logits = jax.random.normal(k1, (B, C), dtype=jnp.float32)
    target1 = jax.random.randint(k2, (B,), 0, C, dtype=jnp.int32)
    target2 = jax.random.randint(k2, (B,), 0, C, dtype=jnp.int32)  # unused by forward

    loss = smoothed_cross_entropy_loss(
        logits, target1, target2,
        smoothing_alpha=alpha, num_classes=C, model_idx=model_idx,
        block_b=8)  # small tile -> multi-tile grid even at demo size
    loss = jax.block_until_ready(loss)

    ref = _reference(logits, target1, smoothing_alpha=alpha,
                     num_classes=C, model_idx=model_idx)
    assert jnp.allclose(loss, ref, atol=1e-5, rtol=1e-5), (loss, ref)
    print("KERNEL_OK")
</pallas_src>

<mosaic_0001>
module attributes {stable_mosaic.version = 11 : i64} {
  func.func @_smoothed_ce_kernel(%arg0: i32, %arg1: memref<8x32xf32, #tpu.memory_space<vmem>>, %arg2: memref<8x1xi32, #tpu.memory_space<vmem>>, %arg3: memref<1x8x128xf32, #tpu.memory_space<vmem>>) attributes {dimension_semantics = [#tpu.dimension_semantics<parallel>], iteration_bounds = array<i64: 2>, scalar_prefetch = 0 : i64, scratch_operands = 0 : i64, tpu.core_type = #tpu.core_type<tc>, window_params = [{transform_indices = @transform_0, window_bounds = array<i64: 8, 32>}, {transform_indices = @transform_1, window_bounds = array<i64: 8, 1>}, {transform_indices = @transform_2, window_bounds = array<i64: 1, 8, 128>}]} {
    %c0 = arith.constant 0 : index
    %c0_0 = arith.constant 0 : index
    %0 = vector.load %arg1[%c0, %c0_0] : memref<8x32xf32, #tpu.memory_space<vmem>>, vector<8x32xf32>
    %cst = arith.constant dense<0xFF800000> : vector<8xf32>
    %1 = vector.multi_reduction <maximumf>, %0, %cst [1] : vector<8x32xf32> to vector<8xf32>
    %2 = vector.shape_cast %1 : vector<8xf32> to vector<8x1xf32>
    %3 = vector.broadcast %2 : vector<8x1xf32> to vector<8x32xf32>
    %4 = arith.subf %0, %3 : vector<8x32xf32>
    %5 = math.exp %4 : vector<8x32xf32>
    %cst_1 = arith.constant dense<0.000000e+00> : vector<8xf32>
    %6 = vector.multi_reduction <add>, %5, %cst_1 [1] : vector<8x32xf32> to vector<8xf32>
    %7 = vector.shape_cast %6 : vector<8xf32> to vector<8x1xf32>
    %8 = math.log %7 : vector<8x1xf32>
    %cst_2 = arith.constant dense<0.000000e+00> : vector<8xf32>
    %9 = vector.multi_reduction <add>, %4, %cst_2 [1] : vector<8x32xf32> to vector<8xf32>
    %10 = vector.shape_cast %9 : vector<8xf32> to vector<8x1xf32>
    %cst_3 = arith.constant 3.200000e+01 : f32
    %11 = vector.broadcast %cst_3 : f32 to vector<8x1xf32>
    %12 = arith.mulf %11, %8 : vector<8x1xf32>
    %13 = arith.subf %10, %12 : vector<8x1xf32>
    %14 = tpu.iota {dimensions = array<i32: 1>} : vector<8x32xi32>
    %c0_4 = arith.constant 0 : index
    %c0_5 = arith.constant 0 : index
    %15 = vector.load %arg2[%c0_4, %c0_5] : memref<8x1xi32, #tpu.memory_space<vmem>>, vector<8x1xi32>
    %16 = vector.broadcast %15 : vector<8x1xi32> to vector<8x32xi32>
    %17 = arith.cmpi eq, %14, %16 : vector<8x32xi32>
    %cst_6 = arith.constant 0.000000e+00 : f32
    %18 = vector.broadcast %cst_6 : f32 to vector<8x32xf32>
    %19 = arith.select %17, %4, %18 : vector<8x32xi1>, vector<8x32xf32>
    %cst_7 = arith.constant dense<0.000000e+00> : vector<8xf32>
    %20 = vector.multi_reduction <add>, %19, %cst_7 [1] : vector<8x32xf32> to vector<8xf32>
    %21 = vector.shape_cast %20 : vector<8xf32> to vector<8x1xf32>
    %22 = arith.subf %21, %8 : vector<8x1xf32>
    %cst_8 = arith.constant 0.0032258064 : f32
    %23 = vector.broadcast %cst_8 : f32 to vector<8x1xf32>
    %24 = arith.mulf %23, %13 : vector<8x1xf32>
    %cst_9 = arith.constant 0.896774172 : f32
    %25 = vector.broadcast %cst_9 : f32 to vector<8x1xf32>
    %26 = arith.mulf %25, %22 : vector<8x1xf32>
    %27 = arith.addf %24, %26 : vector<8x1xf32>
    %cst_10 = arith.constant 0.000000e+00 : f32
    %28 = vector.broadcast %cst_10 : f32 to vector<8x1xf32>
    %29 = arith.subf %28, %27 : vector<8x1xf32>
    %c8_i32 = arith.constant 8 : i32
    %30 = arith.muli %arg0, %c8_i32 : i32
    %31 = tpu.iota {dimensions = array<i32: 0>} : vector<8x1xi32>
    %32 = vector.broadcast %30 : i32 to vector<8x1xi32>
    %33 = arith.addi %32, %31 : vector<8x1xi32>
    %c12_i32 = arith.constant 12 : i32
    %34 = vector.broadcast %c12_i32 : i32 to vector<8x1xi32>
    %35 = arith.cmpi slt, %33, %34 : vector<8x1xi32>
    %cst_11 = arith.constant 0.000000e+00 : f32
    %36 = vector.broadcast %cst_11 : f32 to vector<8x1xf32>
    %37 = arith.select %35, %29, %36 : vector<8x1xi1>, vector<8x1xf32>
    %38 = vector.shape_cast %37 : vector<8x1xf32> to vector<1x8x1xf32>
    %cst_12 = arith.constant dense<0.000000e+00> : vector<1xf32>
    %39 = vector.multi_reduction <add>, %38, %cst_12 [1, 2] : vector<1x8x1xf32> to vector<1xf32>
    %40 = vector.shape_cast %39 : vector<1xf32> to vector<1x1x1xf32>
    %41 = vector.extract %40[0, 0, 0] : f32 from vector<1x1x1xf32>
    %42 = vector.broadcast %41 : f32 to vector<1x8x128xf32>
    %c0_13 = arith.constant 0 : index
    %c0_14 = arith.constant 0 : index
    %c0_15 = arith.constant 0 : index
    %43 = vector.load %arg3[%c0_13, %c0_14, %c0_15] : memref<1x8x128xf32, #tpu.memory_space<vmem>>, vector<1x8x128xf32>
    tpu.vector_store %arg3[%c0_13, %c0_14, %c0_15], %42 {strides = array<i32>} : memref<1x8x128xf32, #tpu.memory_space<vmem>>, vector<1x8x128xf32>,
    return
  }
  func.func @transform_0(%arg0: i32) -> (i32, i32) {
    %c0_i32 = arith.constant 0 : i32
    %c0_i32_0 = arith.constant 0 : i32
    return %arg0, %c0_i32 : i32, i32
  }
  func.func @transform_1(%arg0: i32) -> (i32, i32) {
    %c0_i32 = arith.constant 0 : i32
    %c0_i32_0 = arith.constant 0 : i32
    return %arg0, %c0_i32 : i32, i32
  }
  func.func @transform_2(%arg0: i32) -> (i32, i32, i32) {
    %c0_i32 = arith.constant 0 : i32
    %c0_i32_0 = arith.constant 0 : i32
    %c0_i32_1 = arith.constant 0 : i32
    return %arg0, %c0_i32, %c0_i32_0 : i32, i32, i32
  }
}

</mosaic_0001>

<llo_original>
// kernel: tpu_custom_call.1
$region0: #{tpu_custom_call.1}
  #allocation0 [shape = 'u32[]', space=smem, size = 0x4, offset = 0x4, fixed_abs, tag = 'smem constant byte address 0x4 - core index']
  #allocation1 [shape = 'u32[144,128]{1,0:T(1,128)}', space=vmem, size = 0x12000, scoped, tag = 'internal scratch']
  %s0 = inlined_call_operand.vmem [shape: f32[16,32], index: 0, kind: input, shape index: {}]
  %s1 = inlined_call_operand.vmem [shape: s32[16,1], index: 1, kind: input, shape index: {}]
  %s2 = inlined_call_operand.hbm [shape: f32[2,8,128], index: 2, kind: output, shape index: {}]
  %s3 = sld [smem:[#allocation0]]
  $region41: #{tpu_custom_call.1} parent=0
    _
  %s5 = ssub.s32 1, %s3
  %s6 = scalar_select 0, %s5, %s3
  $region1: #{tpu_custom_call.1} parent=0
    #allocation2 [shape = 'u8[8192]{0}', space=vmem, size = 0x2000, scoped, tag = 'output window, operand 0']
    #allocation3 [shape = 's32[2]{0}', space=sflag, size = 0x8, scoped, tag = 'scoped memory for tpu_custom_call.1']
    %7 = vsyncpa [#allocation3], 0
    %s8 = scalar_lea.sflag [#allocation3], 1
    %9 = vsyncpa %s8, 0
    loop: start=0, step=1, limit=4
    $region2: #{tpu_custom_call.1} parent=1 // loop_pre_header
      _
    $region3: #{tpu_custom_call.1} parent=1 // loop_header
      %s11 = sphi 0, %s15
      %p12 = scmp.ge.s32.totalorder %s11, 4
      %s21 = sphi 0, %s23
      %s24 = sphi 0, %s21
      %s25 = sphi 0, %s24
      %s41 = sphi 0, %s25
      %s47 = sphi 0, %s49
      %s50 = sphi 0, %s47
      %s51 = sphi 0, %s50
      %s67 = sphi 0, %s51
      %s73 = sphi 0, %s75
      %s76 = sphi 0, %s73
      %s77 = sphi 0, %s76
      %s93 = sphi 0, %s77
    $region4: #{tpu_custom_call.1} parent=1 // loop_header_branch
      %14 = sbr.rel (%p12) target = $region8
    $region5: #{tpu_custom_call.1} parent=1 // loop_body
      %s16 = ssub.s32 %s11, 1
      %s17 = ssub.s32 %s11, 2
      %s18 = sadd.s32 %s11, 1
      %s19 = ssub.s32 %s11, %s18
      %p20 = scmp.eq.s32.totalorder %s19, 0
      %s22 = sadd.s32 %s21, 1
      %s23 = scalar_select %p20, %s21, %s22
      %p26 = pneg %p20
      %p27 = scmp.eq.s32.totalorder %s11, 1
      %p28 = por %p26, %p27
      %p29 = scmp.ne.s32.totalorder %s21, %s24
      %p30 = scmp.eq.s32.totalorder %s11, 0
      %p31 = por %p29, %p30
      %p32 = scmp.ne.s32.totalorder %s21, %s24
      %p33 = scmp.eq.s32.totalorder %s16, 1
      %p34 = por %p32, %p33
      %p35 = scmp.ne.s32.totalorder %s24, %s25
      %p36 = scmp.eq.s32.totalorder %s16, 0
      %p37 = por %p35, %p36
      %p38 = scmp.ne.s32.totalorder %s24, %s25
      %p39 = scmp.eq.s32.totalorder %s17, 1
      %p40 = por %p38, %p39
      %p42 = scmp.ne.s32.totalorder %s25, %s41
      %p43 = scmp.eq.s32.totalorder %s17, 0
      %p44 = por %p42, %p43
      %s45 = ssub.s32 %s11, %s18
      %p46 = scmp.eq.s32.totalorder %s45, 0
      %s48 = sadd.s32 %s47, 1
      %s49 = scalar_select %p46, %s47, %s48
      %p52 = pneg %p46
      %p53 = scmp.eq.s32.totalorder %s11, 1
      %p54 = por %p52, %p53
      %p55 = scmp.ne.s32.totalorder %s47, %s50
      %p56 = scmp.eq.s32.totalorder %s11, 0
      %p57 = por %p55, %p56
      %p58 = scmp.ne.s32.totalorder %s47, %s50
      %p59 = scmp.eq.s32.totalorder %s16, 1
      %p60 = por %p58, %p59
      %p61 = scmp.ne.s32.totalorder %s50, %s51
      %p62 = scmp.eq.s32.totalorder %s16, 0
      %p63 = por %p61, %p62
      %p64 = scmp.ne.s32.totalorder %s50, %s51
      %p65 = scmp.eq.s32.totalorder %s17, 1
      %p66 = por %p64, %p65
      %p68 = scmp.ne.s32.totalorder %s51, %s67
      %p69 = scmp.eq.s32.totalorder %s17, 0
      %p70 = por %p68, %p69
      %s71 = ssub.s32 %s11, %s18
      %p72 = scmp.eq.s32.totalorder %s71, 0
      %s74 = sadd.s32 %s73, 1
      %s75 = scalar_select %p72, %s73, %s74
      %p78 = pneg %p72
      %p79 = scmp.eq.s32.totalorder %s11, 1
      %p80 = por %p78, %p79
      %p81 = scmp.ne.s32.totalorder %s73, %s76
      %p82 = scmp.eq.s32.totalorder %s11, 0
      %p83 = por %p81, %p82
      %p84 = scmp.ne.s32.totalorder %s73, %s76
      %p85 = scmp.eq.s32.totalorder %s16, 1
      %p86 = por %p84, %p85
      %p87 = scmp.ne.s32.totalorder %s76, %s77
      %p88 = scmp.eq.s32.totalorder %s16, 0
      %p89 = por %p87, %p88
      %p90 = scmp.ne.s32.totalorder %s76, %s77
      %p91 = scmp.eq.s32.totalorder %s17, 1
      %p92 = por %p90, %p91
      %p94 = scmp.ne.s32.totalorder %s77, %s93
      %p95 = scmp.eq.s32.totalorder %s17, 0
      %p96 = por %p94, %p95
      %p97 = scmp.le.s32.totalorder 1, %s11
      %p98 = scmp.lt.s32.totalorder %s11, 3
      %p99 = pnand %p97, %p98
      %p100 = pneg %p99
      // Predicated region
      $region9: #{tpu_custom_call.1} parent=5 // pred_check
        _
      $region10: #{tpu_custom_call.1} parent=5 // pred_check_branch
        %102 = sbr.rel (%p99) target = $region12
      $region11: #{tpu_custom_call.1} parent=5 // pred_region
        %s103 = ssub.s32 %s11, 1
      $region12: #{tpu_custom_call.1} parent=5 // pred_fallthru
        _
      %p104 = scmp.lt.s32.totalorder %s11, 2
      // Predicated region
      $region13: #{tpu_custom_call.1} parent=5 // pred_check
        %p105 = pneg %p104
      $region14: #{tpu_custom_call.1} parent=5 // pred_check_branch
        %107 = sbr.rel (%p105) target = $region16
      $region15: #{tpu_custom_call.1} parent=5 // pred_region
        // Predicated region
        $region17: #{tpu_custom_call.1} parent=15 // pred_check
          %p108 = pneg %p31
        $region18: #{tpu_custom_call.1} parent=15 // pred_check_branch
          %110 = sbr.rel (%p108) target = $region20
        $region19: #{tpu_custom_call.1} parent=15 // pred_region
          %p111 = scmp.lt.s32.totalorder %s11, 1
          %s112 = scalar_select %p111, %s11, 1
          %s113 = smul.addr %s112, 8
          %s114 = scalar_lea.vmem %s0, %s113
        $region20: #{tpu_custom_call.1} parent=15 // pred_fallthru
          _
        // Predicated region
        $region21: #{tpu_custom_call.1} parent=15 // pred_check
          %p115 = pneg %p57
        $region22: #{tpu_custom_call.1} parent=15 // pred_check_branch
          %117 = sbr.rel (%p115) target = $region24
        $region23: #{tpu_custom_call.1} parent=15 // pred_region
          %p118 = scmp.lt.s32.totalorder %s11, 1
          %s119 = scalar_select %p118, %s11, 1
          %s120 = smul.addr %s119, 8
          %s121 = scalar_lea.vmem %s1, %s120
        $region24: #{tpu_custom_call.1} parent=15 // pred_fallthru
          _
      $region16: #{tpu_custom_call.1} parent=5 // pred_fallthru
        _
      %p122 = scmp.le.s32.totalorder 1, %s11
      %p123 = scmp.lt.s32.totalorder %s11, 3
      %p124 = pnand %p122, %p123
      %p125 = pneg %p124
      // Predicated region
      $region25: #{tpu_custom_call.1} parent=5 // pred_check
        _
      $region26: #{tpu_custom_call.1} parent=5 // pred_check_branch
        %127 = sbr.rel (%p124) target = $region28
      $region27: #{tpu_custom_call.1} parent=5 // pred_region
        %s128 = ssub.s32 %s11, 1
        %p129 = scmp.lt.s32.totalorder %s16, 1
        %s130 = scalar_select %p129, %s16, 1
        %s131 = smul.addr %s130, 8
        %s132 = scalar_lea.vmem %s0, %s131
        %p133 = pneg %p37
        %p134 = pneg %p34
        %p135 = scmp.lt.s32.totalorder %s16, 1
        %s136 = scalar_select %p135, %s16, 1
        %s137 = smul.addr %s136, 8
        %s138 = scalar_lea.vmem %s1, %s137
        %p139 = pneg %p63
        %p140 = pneg %p60
        %p141 = pneg %p89
        %p142 = pneg %p86
        %s143 = sand.u32 %s76, 1
        %s144 = scalar_lea.sflag [#allocation3], %s143
        %s145 = sand.u32 %s76, 1
        %s146 = smul.addr %s145, 8
        %s147 = scalar_lea.vmem [#allocation2], %s146
        %p148 = scmp.lt.s32.totalorder %s16, 1
        %s149 = scalar_select %p148, %s16, 1
        %s150 = smul.addr %s149, 8
        %s151 = scalar_lea.vmem %s0, %s150
        %p152 = scmp.lt.s32.totalorder %s16, 1
        %s153 = scalar_select %p152, %s16, 1
        %s154 = smul.addr %s153, 8
        %s155 = scalar_lea.vmem %s1, %s154
        %v156 = vld [vmem:[%s151] sm:$0xff]
        %vm157 = vcmask 261120
        %v158 = vsel %vm157, %v156, -inf
        %159 = vmax.xlane.f32.xlu0 %v158
        %v160 = vpop.xlane.xlu0 %159
        %v161 = vsub.f32 %v156, %v160
        %v162 = vmul.f32 %v161, 1.442695
        %v163 = vpow.pop %v162
        %v164 = vsel %vm157, %v163, 0.0
        %165 = vadd.xlane.f32.xlu0 %v164
        %v166 = vpop.xlane.xlu0 %165
        %v167 = vlog2.pop %v166
        %v168 = vmul.f32 %v167, 0.6931472
        %v169 = vsel %vm157, %v161, 0.0
        %170 = vadd.xlane.f32.xlu0 %v169
        %v171 = vpop.xlane.xlu0 %170
        %v172 = vmul.f32 %v168, 32.0
        %v173 = vsub.f32 %v171, %v172
        %v174 = vlaneseq
        %v175 = vand.u32 %v174, 127
        %v176 = vld [vmem:[%s155] sm:$0xff]
        %177 = vset.pattern.permute.xlu0 0
        %178 = vperm.xlu0 %177, %v176
        %v179 = vpop.permute.xlu0 %178
        %vm180 = vcmp.eq.s32.totalorder %v175, %v179
        %v181 = vsel %vm180, %v161, 0.0
        %v182 = vsel %vm157, %v181, 0.0
        %183 = vadd.xlane.f32.xlu0 %v182
        %v184 = vpop.xlane.xlu0 %183
        %v185 = vsub.f32 %v184, %v168
        %v186 = vmul.f32 %v173, 0.0032258064
        %v187 = vmul.f32 %v185, 0.8967742
        %v188 = vadd.f32 %v186, %v187
        %v189 = vsub.f32 0.0, %v188
        %s190 = smul.u32 %s16, 8
        %v191 = vlaneseq
        %v192 = vshrl.u32 %v191, 7
        %v193 = vstv %s190
        %v194 = vadd.s32 %v193, %v192
        %vm195 = vcmp.lt.s32.totalorder %v194, 12
        %v196 = vsel %vm195, %v189, 0.0
        %vm197 = vcmask 7168
        %v198 = vsel %vm197, %v196, 0.0
        %199 = vadd.xlane.f32.xlu0 %v198
        %v200 = vpop.xlane.xlu0 %199
        %v201 = vrot.slane %v200, 4
        %v202 = vadd.f32 %v200, %v201
        %v203 = vrot.slane %v202, 2
        %v204 = vadd.f32 %v202, %v203
        %v205 = vrot.slane %v204, 1
        %v206 = vadd.f32 %v204, %v205
        %s207 = vtos %v206
        %v208 = vstv %s207
        %209 = vst [vmem:[%s147] sm:$0xff] %v208
        %s210 = sand.u32 %s76, 1
        %s211 = scalar_lea.sflag [#allocation3], %s210
        %s212 = sand.u32 %s76, 1
        %s213 = smul.addr %s212, 8
        %s214 = scalar_lea.vmem [#allocation2], %s213
        // Predicated region
        $region29: #{tpu_custom_call.1} parent=27 // pred_check
          %p215 = pneg %p86
        $region30: #{tpu_custom_call.1} parent=27 // pred_check_branch
          %217 = sbr.rel (%p215) target = $region32
        $region31: #{tpu_custom_call.1} parent=27 // pred_region
          %s219 = ssub.s32 128, 128
          %220 = vsyncadd %s211, %s219
          %s221 = smul.addr %s16, 128
          %s222 = scalar_lea.hbm %s2, %s221
          %s224 = sshll.u32 %s214, 4
          %s225 = int_to_ptr.vmem [resolvable:$true] %s224
          %227 = dma.vmem_to_hbm [thread:$0]  %s225, 128, %s222, %s211
        $region32: #{tpu_custom_call.1} parent=27 // pred_fallthru
          _
      $region28: #{tpu_custom_call.1} parent=5 // pred_fallthru
        _
      %p228 = scmp.le.s32.totalorder 2, %s11
      // Predicated region
      $region33: #{tpu_custom_call.1} parent=5 // pred_check
        %p229 = pneg %p228
      $region34: #{tpu_custom_call.1} parent=5 // pred_check_branch
        %231 = sbr.rel (%p229) target = $region36
      $region35: #{tpu_custom_call.1} parent=5 // pred_region
        %s232 = ssub.s32 %s11, 2
        // Predicated region
        $region37: #{tpu_custom_call.1} parent=35 // pred_check
          %p233 = pneg %p92
        $region38: #{tpu_custom_call.1} parent=35 // pred_check_branch
          %235 = sbr.rel (%p233) target = $region40
        $region39: #{tpu_custom_call.1} parent=35 // pred_region
          %s236 = sand.u32 %s77, 1
          %s237 = scalar_lea.sflag [#allocation3], %s236
          %s238 = sand.u32 %s77, 1
          %s239 = smul.addr %s238, 8
          %s240 = scalar_lea.vmem [#allocation2], %s239
          %241 = dma.done %s237, 128
        $region40: #{tpu_custom_call.1} parent=35 // pred_fallthru
          _
      $region36: #{tpu_custom_call.1} parent=5 // pred_fallthru
        _
    $region6: #{tpu_custom_call.1} parent=1 // loop_footer
      %s15 = sadd.s32 1, %s11
    $region7: #{tpu_custom_call.1} parent=1 // loop_footer_branch
      %10 = sbr.rel target = $region3
    $region8: #{tpu_custom_call.1} parent=1 // loop_exit
      _
    %242 = vsyncpa [#allocation3], 1
    %s243 = scalar_lea.sflag [#allocation3], 1
    %244 = vsyncpa %s243, 1

</llo_original>
